<compile_context>
chip_gen: v6e
topology: v6e:2x2x1
jax: 0.10.0
libtpu: 0.0.40
codegen_flags: <defaults>
</compile_context>

<pallas_src>
from functools import partial

import jax
import jax.numpy as jnp
import numpy as np
from jax.experimental import pallas as pl
from jax.experimental.pallas import tpu as pltpu


def _rup(x, m):
    return ((x + m - 1) // m) * m


# ----------------------------------------------------------------------------
# Kernel
# ----------------------------------------------------------------------------
def fairtune_kernel(x_ref, we_ref, wa_ref, bstk_ref, mask_ref, wc_ref, bc_ref,
                    logits_ref, hid_ref, acc_ref, *, d_pad):
    """Grid axis k tiles the embedding contraction dimension F.

    x_ref    : [B_pad, TF]               bf16, pixel tile (streamed over k)
    we_ref   : [TF, D_pad]               bf16, embedding weight tile (streamed)
    wa_ref   : [D_pad, D_pad + GR_pad]   bf16, [ W | A_stk ] fused (resident)
    bstk_ref : [GR_pad, D_pad]           bf16, scaling * B_stk (resident)
    mask_ref : [B_pad, GR_pad]           f32, per-row one-hot-by-group column mask
    wc_ref   : [D_pad, C_pad]            bf16, classifier weight
    bc_ref   : [1, C_pad]                f32, classifier bias
    acc_ref  : [B_pad, D_pad]            f32 VMEM scratch (embedding accumulator)
    """
    k = pl.program_id(0)

    @pl.when(k == 0)
    def _init():
        acc_ref[...] = jnp.zeros_like(acc_ref)

    # get_embeddings: streamed contraction, bf16 MXU inputs, f32 accumulation.
    acc_ref[...] += jnp.dot(x_ref[...], we_ref[...],
                            preferred_element_type=jnp.float32)

    @pl.when(k == pl.num_programs(0) - 1)
    def _tail():
        emb = acc_ref[...]                                  # [B_pad, D_pad] f32
        emb_bf = emb.astype(jnp.bfloat16)

        # Fused frozen base linear + stacked LoRA-A: one MXU pass.
        hax = jnp.dot(emb_bf, wa_ref[...],
                      preferred_element_type=jnp.float32)   # [B_pad, D_pad+GR_pad]
        h_base = hax[:, :d_pad]                             # emb @ W
        ax_all = hax[:, d_pad:]                             # emb @ A_stk   [B, GR_pad]

        # Demographic-group selection: zero columns of other groups (f32 VPU),
        # then one stacked LoRA-B matmul (scaling already folded into B_stk).
        ax_masked = (ax_all * mask_ref[...]).astype(jnp.bfloat16)
        bax = jnp.dot(ax_masked, bstk_ref[...],
                      preferred_element_type=jnp.float32)   # [B_pad, D_pad]

        h = h_base + bax                                    # last_hidden_state

        # Classifier head.
        logits = jnp.dot(h.astype(jnp.bfloat16), wc_ref[...],
                         preferred_element_type=jnp.float32) + bc_ref[...]

        hid_ref[...] = h
        logits_ref[...] = logits


# ----------------------------------------------------------------------------
# Parameter packing (done once, outside the forward)
# ----------------------------------------------------------------------------
def pack_params(params, *, num_groups, rank, scaling, tf=256):
    """Pad to lane-dense shapes, stack the per-group LoRA matrices, fuse W with
    A_stk, fold the LoRA scaling into B_stk, and store MXU operands in bf16."""
    we, w, a, b, wc, bc = (params[k] for k in ("we", "w", "a", "b", "wc", "bc"))
    F, D = we.shape
    n_cls = wc.shape[1]
    GR = num_groups * rank

    D_pad = _rup(D, 128)
    C_pad = _rup(n_cls, 128)
    GR_pad = _rup(GR, 128)
    F_pad = _rup(F, tf)

    we_p = jnp.pad(we, ((0, F_pad - F), (0, D_pad - D))).astype(jnp.bfloat16)

    w_p = jnp.pad(w, ((0, D_pad - D), (0, D_pad - D)))
    a_stk = jnp.transpose(a, (1, 0, 2)).reshape(D, GR)          # [D, G*r]
    a_p = jnp.pad(a_stk, ((0, D_pad - D), (0, GR_pad - GR)))
    wa = jnp.concatenate([w_p, a_p], axis=1).astype(jnp.bfloat16)

    b_stk = scaling * b.reshape(GR, D)                          # fold scaling
    b_p = jnp.pad(b_stk, ((0, GR_pad - GR), (0, D_pad - D))).astype(jnp.bfloat16)

    wc_p = jnp.pad(wc, ((0, D_pad - D), (0, C_pad - n_cls))).astype(jnp.bfloat16)
    bc_p = jnp.pad(bc, ((0, 0), (0, C_pad - n_cls))).astype(jnp.float32)

    dims = dict(F=F, F_pad=F_pad, D=D, D_pad=D_pad, n_cls=n_cls, C_pad=C_pad,
                GR=GR, GR_pad=GR_pad, tf=tf, rank=rank)
    return dict(we=we_p, wa=wa, b_stk=b_p, wc=wc_p, bc=bc_p, dims=dims)


# ----------------------------------------------------------------------------
# Forward wrapper
# ----------------------------------------------------------------------------
def fairtune_forward(images, group_ids, packed):
    d = packed["dims"]
    F, F_pad, D, D_pad = d["F"], d["F_pad"], d["D"], d["D_pad"]
    n_cls, C_pad = d["n_cls"], d["C_pad"]
    GR, GR_pad, tf, rank = d["GR"], d["GR_pad"], d["tf"], d["rank"]

    B = images.shape[0]
    B_pad = max(8, _rup(B, 8))

    x = images.reshape(B, -1)
    x_p = jnp.pad(x, ((0, B_pad - B), (0, F_pad - F))).astype(jnp.bfloat16)

    # Per-row group-column mask [B_pad, GR_pad]: mask[i, g*r+j] = (gid[i]==g).
    gid = group_ids.astype(jnp.int32)
    cols = jnp.arange(GR_pad, dtype=jnp.int32)
    mask = ((cols[None, :] // rank == gid[:, None])
            & (cols[None, :] < GR)).astype(jnp.float32)
    mask = jnp.pad(mask, ((0, B_pad - B), (0, 0)))

    kernel = partial(fairtune_kernel, d_pad=D_pad)

    logits_p, hid_p = pl.pallas_call(
        kernel,
        out_shape=(
            jax.ShapeDtypeStruct((B_pad, C_pad), jnp.float32),
            jax.ShapeDtypeStruct((B_pad, D_pad), jnp.float32),
        ),
        grid_spec=pltpu.PrefetchScalarGridSpec(
            num_scalar_prefetch=0,
            grid=(F_pad // tf,),
            in_specs=[
                pl.BlockSpec((B_pad, tf), lambda k: (0, k)),          # x tile
                pl.BlockSpec((tf, D_pad), lambda k: (k, 0)),          # we tile
                pl.BlockSpec((D_pad, D_pad + GR_pad), lambda k: (0, 0)),  # [W|A]
                pl.BlockSpec((GR_pad, D_pad), lambda k: (0, 0)),      # B_stk
                pl.BlockSpec((B_pad, GR_pad), lambda k: (0, 0)),      # mask
                pl.BlockSpec((D_pad, C_pad), lambda k: (0, 0)),       # wc
                pl.BlockSpec((1, C_pad), lambda k: (0, 0)),           # bc
            ],
            out_specs=[
                pl.BlockSpec((B_pad, C_pad), lambda k: (0, 0)),
                pl.BlockSpec((B_pad, D_pad), lambda k: (0, 0)),
            ],
            scratch_shapes=[pltpu.VMEM((B_pad, D_pad), jnp.float32)],
        ),
        compiler_params=pltpu.CompilerParams(
            dimension_semantics=("arbitrary",),   # contraction axis
        ),
    )(x_p, packed["we"], packed["wa"], packed["b_stk"], mask,
      packed["wc"], packed["bc"])

    # Mirrors the PyTorch forward: 'embeddings' = post-adapter last_hidden_state.
    return {"logits": logits_p[:B, :n_cls], "embeddings": hid_p[:B, :D]}


# ----------------------------------------------------------------------------
# Synthetic params + pure-JAX reference
# ----------------------------------------------------------------------------
def init_params(key, feat_in, hidden, rank, num_groups, num_classes):
    k = jax.random.split(key, 5)
    we = jax.random.normal(k[0], (feat_in, hidden), jnp.float32) * 0.02
    w = jax.random.normal(k[1], (hidden, hidden), jnp.float32) * 0.02
    a = jax.random.normal(k[2], (num_groups, hidden, rank), jnp.float32) * 0.1
    b = jax.random.normal(k[3], (num_groups, rank, hidden), jnp.float32) * 0.1
    wc = jax.random.normal(k[4], (hidden, num_classes), jnp.float32) * 0.02
    bc = jnp.zeros((1, num_classes), jnp.float32)
    return {"we": we, "w": w, "a": a, "b": b, "wc": wc, "bc": bc}


def reference_forward(images, group_ids, params, *, num_groups, scaling):
    B = images.shape[0]
    x = images.reshape(B, -1)
    emb = x @ params["we"]
    h = emb @ params["w"]
    lora = jnp.zeros_like(h)
    for g in range(num_groups):
        bax = (emb @ params["a"][g]) @ params["b"][g]
        lora = lora + jnp.where(group_ids[:, None] == g, bax, 0.0)
    h = h + scaling * lora
    logits = h @ params["wc"] + params["bc"]
    return {"logits": logits, "embeddings": h}


# ----------------------------------------------------------------------------
if __name__ == "__main__":
    # Small shapes consistent with the module's image-classification forward.
    B, C, H, W = 2, 4, 16, 16          # images: NCHW
    hidden = 32                        # embedding / hidden dim
    rank = 4                           # LoRA rank
    lora_alpha = 8.0
    num_groups = 3                     # demographic groups
    num_classes = 8
    tf = 256                           # contraction tile over F = C*H*W

    key = jax.random.PRNGKey(0)
    k_img, k_par = jax.random.split(key)
    images = jax.random.normal(k_img, (B, C, H, W), jnp.float32)

    # demographics: list of group identifiers per sample -> integer ids (glue)
    demographics = ["group_a", "group_b"]
    group_vocab = {"group_a": 0, "group_b": 1, "group_c": 2}
    group_ids = jnp.array([group_vocab[d] for d in demographics], jnp.int32)

    params = init_params(k_par, C * H * W, hidden, rank, num_groups, num_classes)
    scaling = lora_alpha / rank
    packed = pack_params(params, num_groups=num_groups, rank=rank,
                         scaling=scaling, tf=tf)

    out = fairtune_forward(images, group_ids, packed)
    jax.block_until_ready(out)

    assert out["logits"].shape == (B, num_classes)
    assert out["embeddings"].shape == (B, hidden)

    # Numerics: pure-f32 reference; kernel uses bf16 MXU operands -> loose tol.
    ref = reference_forward(images, group_ids, params,
                            num_groups=num_groups, scaling=scaling)
    np.testing.assert_allclose(np.asarray(out["embeddings"]),
                               np.asarray(ref["embeddings"]),
                               rtol=5e-2, atol=5e-3)
    np.testing.assert_allclose(np.asarray(out["logits"]),
                               np.asarray(ref["logits"]),
                               rtol=5e-2, atol=5e-3)

    print("KERNEL_OK")
</pallas_src>

<mosaic_0001>
module attributes {stable_mosaic.version = 11 : i64} {
  func.func @fairtune_kernel(%arg0: i32, %arg1: memref<8x256xbf16, #tpu.memory_space<vmem>>, %arg2: memref<256x128xbf16, #tpu.memory_space<vmem>>, %arg3: memref<128x256xbf16, #tpu.memory_space<vmem>>, %arg4: memref<128x128xbf16, #tpu.memory_space<vmem>>, %arg5: memref<8x128xf32, #tpu.memory_space<vmem>>, %arg6: memref<128x128xbf16, #tpu.memory_space<vmem>>, %arg7: memref<1x128xf32, #tpu.memory_space<vmem>>, %arg8: memref<8x128xf32, #tpu.memory_space<vmem>>, %arg9: memref<8x128xf32, #tpu.memory_space<vmem>>, %arg10: memref<8x128xf32, #tpu.memory_space<vmem>>) attributes {dimension_semantics = [#tpu.dimension_semantics<arbitrary>], iteration_bounds = array<i64: 4>, scalar_prefetch = 0 : i64, scratch_operands = 1 : i64, tpu.core_type = #tpu.core_type<tc>, window_params = [{transform_indices = @transform_0, window_bounds = array<i64: 8, 256>}, {transform_indices = @transform_1, window_bounds = array<i64: 256, 128>}, {pipeline_mode = #tpu.pipeline_mode<synchronous>, transform_indices = @transform_2, window_bounds = array<i64: 128, 256>}, {pipeline_mode = #tpu.pipeline_mode<synchronous>, transform_indices = @transform_3, window_bounds = array<i64: 128, 128>}, {pipeline_mode = #tpu.pipeline_mode<synchronous>, transform_indices = @transform_4, window_bounds = array<i64: 8, 128>}, {pipeline_mode = #tpu.pipeline_mode<synchronous>, transform_indices = @transform_5, window_bounds = array<i64: 128, 128>}, {pipeline_mode = #tpu.pipeline_mode<synchronous>, transform_indices = @transform_6, window_bounds = array<i64: 1, 128>}, {pipeline_mode = #tpu.pipeline_mode<synchronous>, transform_indices = @transform_7, window_bounds = array<i64: 8, 128>}, {pipeline_mode = #tpu.pipeline_mode<synchronous>, transform_indices = @transform_8, window_bounds = array<i64: 8, 128>}]} {
    %c0_i32 = arith.constant 0 : i32
    %0 = arith.cmpi eq, %arg0, %c0_i32 : i32
    %1 = arith.extui %0 : i1 to i32
    %c0_i32_0 = arith.constant 0 : i32
    %2 = arith.cmpi ne, %1, %c0_i32_0 : i32
    scf.if %2 {
      %cst_9 = arith.constant 0.000000e+00 : f32
      %12 = vector.broadcast %cst_9 : f32 to vector<8x128xf32>
      %c0_10 = arith.constant 0 : index
      %c0_11 = arith.constant 0 : index
      %13 = vector.load %arg10[%c0_10, %c0_11] : memref<8x128xf32, #tpu.memory_space<vmem>>, vector<8x128xf32>
      tpu.vector_store %arg10[%c0_10, %c0_11], %12 {strides = array<i32>} : memref<8x128xf32, #tpu.memory_space<vmem>>, vector<8x128xf32>,
    } else {
    }
    %c0 = arith.constant 0 : index
    %c0_1 = arith.constant 0 : index
    %3 = vector.load %arg10[%c0, %c0_1] : memref<8x128xf32, #tpu.memory_space<vmem>>, vector<8x128xf32>
    %c0_2 = arith.constant 0 : index
    %c0_3 = arith.constant 0 : index
    %4 = vector.load %arg1[%c0_2, %c0_3] : memref<8x256xbf16, #tpu.memory_space<vmem>>, vector<8x256xbf16>
    %c0_4 = arith.constant 0 : index
    %c0_5 = arith.constant 0 : index
    %5 = vector.load %arg2[%c0_4, %c0_5] : memref<256x128xbf16, #tpu.memory_space<vmem>>, vector<256x128xbf16>
    %cst = arith.constant dense<0.000000e+00> : vector<8x128xf32>
    %6 = tpu.matmul %4, %5, %cst {dimension_numbers = #tpu.dot_dimension_numbers<[1], [0], [0], [1], [0, 0, 1, 1], [], []>} : vector<8x256xbf16>, vector<256x128xbf16>, vector<8x128xf32> -> vector<8x128xf32>
    %7 = arith.addf %3, %6 : vector<8x128xf32>
    %c0_6 = arith.constant 0 : index
    %c0_7 = arith.constant 0 : index
    %8 = vector.load %arg10[%c0_6, %c0_7] : memref<8x128xf32, #tpu.memory_space<vmem>>, vector<8x128xf32>
    tpu.vector_store %arg10[%c0_6, %c0_7], %7 {strides = array<i32>} : memref<8x128xf32, #tpu.memory_space<vmem>>, vector<8x128xf32>,
    %c3_i32 = arith.constant 3 : i32
    %9 = arith.cmpi eq, %arg0, %c3_i32 : i32
    %10 = arith.extui %9 : i1 to i32
    %c0_i32_8 = arith.constant 0 : i32
    %11 = arith.cmpi ne, %10, %c0_i32_8 : i32
    scf.if %11 {
      %c0_9 = arith.constant 0 : index
      %c0_10 = arith.constant 0 : index
      %12 = vector.load %arg10[%c0_9, %c0_10] : memref<8x128xf32, #tpu.memory_space<vmem>>, vector<8x128xf32>
      %13 = arith.truncf %12 : vector<8x128xf32> to vector<8x128xbf16>
      %c0_11 = arith.constant 0 : index
      %c0_12 = arith.constant 0 : index
      %14 = vector.load %arg3[%c0_11, %c0_12] : memref<128x256xbf16, #tpu.memory_space<vmem>>, vector<128x256xbf16>
      %cst_13 = arith.constant dense<0.000000e+00> : vector<8x256xf32>
      %15 = tpu.matmul %13, %14, %cst_13 {dimension_numbers = #tpu.dot_dimension_numbers<[1], [0], [0], [1], [0, 0, 1, 1], [], []>} : vector<8x128xbf16>, vector<128x256xbf16>, vector<8x256xf32> -> vector<8x256xf32>
      %16 = vector.extract_strided_slice %15 {offsets = [0, 0], sizes = [8, 128], strides = [1, 1]} : vector<8x256xf32> to vector<8x128xf32>
      %17 = vector.extract_strided_slice %15 {offsets = [0, 128], sizes = [8, 128], strides = [1, 1]} : vector<8x256xf32> to vector<8x128xf32>
      %c0_14 = arith.constant 0 : index
      %c0_15 = arith.constant 0 : index
      %18 = vector.load %arg5[%c0_14, %c0_15] : memref<8x128xf32, #tpu.memory_space<vmem>>, vector<8x128xf32>
      %19 = arith.mulf %17, %18 : vector<8x128xf32>
      %20 = arith.truncf %19 : vector<8x128xf32> to vector<8x128xbf16>
      %c0_16 = arith.constant 0 : index
      %c0_17 = arith.constant 0 : index
      %21 = vector.load %arg4[%c0_16, %c0_17] : memref<128x128xbf16, #tpu.memory_space<vmem>>, vector<128x128xbf16>
      %cst_18 = arith.constant dense<0.000000e+00> : vector<8x128xf32>
      %22 = tpu.matmul %20, %21, %cst_18 {dimension_numbers = #tpu.dot_dimension_numbers<[1], [0], [0], [1], [0, 0, 1, 1], [], []>} : vector<8x128xbf16>, vector<128x128xbf16>, vector<8x128xf32> -> vector<8x128xf32>
      %23 = arith.addf %16, %22 : vector<8x128xf32>
      %24 = arith.truncf %23 : vector<8x128xf32> to vector<8x128xbf16>
      %c0_19 = arith.constant 0 : index
      %c0_20 = arith.constant 0 : index
      %25 = vector.load %arg6[%c0_19, %c0_20] : memref<128x128xbf16, #tpu.memory_space<vmem>>, vector<128x128xbf16>
      %cst_21 = arith.constant dense<0.000000e+00> : vector<8x128xf32>
      %26 = tpu.matmul %24, %25, %cst_21 {dimension_numbers = #tpu.dot_dimension_numbers<[1], [0], [0], [1], [0, 0, 1, 1], [], []>} : vector<8x128xbf16>, vector<128x128xbf16>, vector<8x128xf32> -> vector<8x128xf32>
      %c0_22 = arith.constant 0 : index
      %c0_23 = arith.constant 0 : index
      %27 = vector.load %arg7[%c0_22, %c0_23] : memref<1x128xf32, #tpu.memory_space<vmem>>, vector<1x128xf32>
      %28 = vector.broadcast %27 : vector<1x128xf32> to vector<8x128xf32>
      %29 = arith.addf %26, %28 : vector<8x128xf32>
      %c0_24 = arith.constant 0 : index
      %c0_25 = arith.constant 0 : index
      %30 = vector.load %arg9[%c0_24, %c0_25] : memref<8x128xf32, #tpu.memory_space<vmem>>, vector<8x128xf32>
      tpu.vector_store %arg9[%c0_24, %c0_25], %23 {strides = array<i32>} : memref<8x128xf32, #tpu.memory_space<vmem>>, vector<8x128xf32>,
      %c0_26 = arith.constant 0 : index
      %c0_27 = arith.constant 0 : index
      %31 = vector.load %arg8[%c0_26, %c0_27] : memref<8x128xf32, #tpu.memory_space<vmem>>, vector<8x128xf32>
      tpu.vector_store %arg8[%c0_26, %c0_27], %29 {strides = array<i32>} : memref<8x128xf32, #tpu.memory_space<vmem>>, vector<8x128xf32>,
    } else {
    }
    return
  }
  func.func @transform_0(%arg0: i32) -> (i32, i32) {
    %c0_i32 = arith.constant 0 : i32
    %c0_i32_0 = arith.constant 0 : i32
    return %c0_i32, %arg0 : i32, i32
  }
  func.func @transform_1(%arg0: i32) -> (i32, i32) {
    %c0_i32 = arith.constant 0 : i32
    %c0_i32_0 = arith.constant 0 : i32
    return %arg0, %c0_i32 : i32, i32
  }
  func.func @transform_2(%arg0: i32) -> (i32, i32) {
    %c0_i32 = arith.constant 0 : i32
    %c0_i32_0 = arith.constant 0 : i32
    %c0_i32_1 = arith.constant 0 : i32
    return %c0_i32, %c0_i32_0 : i32, i32
  }
  func.func @transform_3(%arg0: i32) -> (i32, i32) {
    %c0_i32 = arith.constant 0 : i32
    %c0_i32_0 = arith.constant 0 : i32
    %c0_i32_1 = arith.constant 0 : i32
    return %c0_i32, %c0_i32_0 : i32, i32
  }
  func.func @transform_4(%arg0: i32) -> (i32, i32) {
    %c0_i32 = arith.constant 0 : i32
    %c0_i32_0 = arith.constant 0 : i32
    %c0_i32_1 = arith.constant 0 : i32
    return %c0_i32, %c0_i32_0 : i32, i32
  }
  func.func @transform_5(%arg0: i32) -> (i32, i32) {
    %c0_i32 = arith.constant 0 : i32
    %c0_i32_0 = arith.constant 0 : i32
    %c0_i32_1 = arith.constant 0 : i32
    return %c0_i32, %c0_i32_0 : i32, i32
  }
  func.func @transform_6(%arg0: i32) -> (i32, i32) {
    %c0_i32 = arith.constant 0 : i32
    %c0_i32_0 = arith.constant 0 : i32
    %c0_i32_1 = arith.constant 0 : i32
    return %c0_i32, %c0_i32_0 : i32, i32
  }
  func.func @transform_7(%arg0: i32) -> (i32, i32) {
    %c0_i32 = arith.constant 0 : i32
    %c0_i32_0 = arith.constant 0 : i32
    %c0_i32_1 = arith.constant 0 : i32
    return %c0_i32, %c0_i32_0 : i32, i32
  }
  func.func @transform_8(%arg0: i32) -> (i32, i32) {
    %c0_i32 = arith.constant 0 : i32
    %c0_i32_0 = arith.constant 0 : i32
    %c0_i32_1 = arith.constant 0 : i32
    return %c0_i32, %c0_i32_0 : i32, i32
  }
}

</mosaic_0001>

<llo_original>
// kernel: tpu_custom_call.1
$region0: #{tpu_custom_call.1}
  #allocation0 [shape = 'u32[]', space=smem, size = 0x4, offset = 0x4, fixed_abs, tag = 'smem constant byte address 0x4 - core index']
  #allocation1 [shape = 'u32[144,128]{1,0:T(1,128)}', space=vmem, size = 0x12000, scoped, tag = 'internal scratch']
  #allocation2 [shape = 'f32[8,128]{1,0:T(8,128)}', space=vmem, size = 0x1000, scoped, tag = 'scratch operand']
  %s0 = inlined_call_operand.hbm [shape: bf16[8,1024], index: 0, kind: input, shape index: {}]
  %s1 = inlined_call_operand.hbm [shape: bf16[1024,128], index: 1, kind: input, shape index: {}]
  %s2 = inlined_call_operand.hbm [shape: bf16[128,256], index: 2, kind: input, shape index: {}]
  %s3 = inlined_call_operand.hbm [shape: bf16[128,128], index: 3, kind: input, shape index: {}]
  %s4 = inlined_call_operand.hbm [shape: f32[8,128], index: 4, kind: input, shape index: {}]
  %s5 = inlined_call_operand.hbm [shape: bf16[128,128], index: 5, kind: input, shape index: {}]
  %s6 = inlined_call_operand.vmem [shape: f32[1,128], index: 6, kind: input, shape index: {}]
  %s7 = inlined_call_operand.hbm [shape: f32[8,128], index: 7, kind: output, shape index: {0}]
  %s8 = inlined_call_operand.hbm [shape: f32[8,128], index: 8, kind: output, shape index: {1}]
  %9 = xla_tuple %s7, %s8
  %s10 = sld [smem:[#allocation0]]
  $region101: #{tpu_custom_call.1} parent=0
    _
  %s12 = ssub.s32 1, %s10
  %s13 = scalar_select 0, %s12, %s10
  $region1: #{tpu_custom_call.1} parent=0
    #allocation3 [shape = 'u8[8192]{0}', space=vmem, size = 0x2000, scoped, tag = 'input window, operand 0']
    #allocation4 [shape = 's32[2]{0}', space=sflag, size = 0x8, scoped, tag = 'scoped memory for tpu_custom_call.1']
    #allocation5 [shape = 's32[2]{0}', space=sflag, size = 0x8, scoped, tag = 'scoped memory for tpu_custom_call.1']
    #allocation6 [shape = 'u8[131072]{0}', space=vmem, size = 0x20000, scoped, tag = 'input window, operand 1']
    #allocation7 [shape = 's32[2]{0}', space=sflag, size = 0x8, scoped, tag = 'scoped memory for tpu_custom_call.1']
    #allocation8 [shape = 'u8[65536]{0}', space=vmem, size = 0x10000, scoped, tag = 'input window, operand 2, single buffered']
    #allocation9 [shape = 'u8[32768]{0}', space=vmem, size = 0x8000, scoped, tag = 'input window, operand 3, single buffered']
    #allocation10 [shape = 's32[1]{0}', space=sflag, size = 0x4, scoped, tag = 'scoped memory for tpu_custom_call.1']
    #allocation11 [shape = 'u8[4096]{0}', space=vmem, size = 0x1000, scoped, tag = 'input window, operand 4, single buffered']
    #allocation12 [shape = 'u8[32768]{0}', space=vmem, size = 0x8000, scoped, tag = 'input window, operand 5, single buffered']
    #allocation13 [shape = 's32[1]{0}', space=sflag, size = 0x4, scoped, tag = 'scoped memory for tpu_custom_call.1']
    #allocation14 [shape = 'u8[4096]{0}', space=vmem, size = 0x1000, scoped, tag = 'output window, operand 0, single buffered']
    #allocation15 [shape = 'u8[4096]{0}', space=vmem, size = 0x1000, scoped, tag = 'output window, operand 1, single buffered']
    #allocation16 [shape = 's32[1]{0}', space=sflag, size = 0x4, scoped, tag = 'scoped memory for tpu_custom_call.1']
    %14 = vsyncpa [#allocation4], 0
    %s15 = scalar_lea.sflag [#allocation4], 1
    %16 = vsyncpa %s15, 0
    %17 = vsyncpa [#allocation7], 0
    %s18 = scalar_lea.sflag [#allocation7], 1
    %19 = vsyncpa %s18, 0
    %20 = vsyncpa [#allocation10], 0
    %21 = vsyncpa [#allocation13], 0
    %22 = vsyncpa [#allocation5], 0
    %23 = vsyncpa [#allocation16], 0
    loop: start=0, step=1, limit=6
    $region2: #{tpu_custom_call.1} parent=1 // loop_pre_header
      _
    $region3: #{tpu_custom_call.1} parent=1 // loop_header
      %s25 = sphi 0, %s29
      %p26 = scmp.ge.s32.totalorder %s25, 6
      %s35 = sphi 0, %s37
      %s38 = sphi 0, %s35
      %s39 = sphi 0, %s38
      %s55 = sphi 0, %s39
      %s61 = sphi 0, %s63
      %s64 = sphi 0, %s61
      %s65 = sphi 0, %s64
      %s81 = sphi 0, %s65
      %s85 = sphi 0, %s85
      %s87 = sphi 0, %s85
      %s88 = sphi 0, %s87
      %s102 = sphi 0, %s88
      %s106 = sphi 0, %s106
      %s108 = sphi 0, %s106
      %s109 = sphi 0, %s108
      %s123 = sphi 0, %s109
      %s127 = sphi 0, %s127
      %s129 = sphi 0, %s127
      %s130 = sphi 0, %s129
      %s144 = sphi 0, %s130
      %s148 = sphi 0, %s148
      %s150 = sphi 0, %s148
      %s151 = sphi 0, %s150
      %s165 = sphi 0, %s151
      %s169 = sphi 0, %s169
      %s171 = sphi 0, %s169
      %s172 = sphi 0, %s171
      %s186 = sphi 0, %s172
      %s190 = sphi 0, %s190
      %s192 = sphi 0, %s190
      %s193 = sphi 0, %s192
      %s207 = sphi 0, %s193
      %s211 = sphi 0, %s211
      %s213 = sphi 0, %s211
      %s214 = sphi 0, %s213
      %s228 = sphi 0, %s214
    $region4: #{tpu_custom_call.1} parent=1 // loop_header_branch
      %28 = sbr.rel (%p26) target = $region8
    $region5: #{tpu_custom_call.1} parent=1 // loop_body
      %s30 = ssub.s32 %s25, 1
      %s31 = ssub.s32 %s25, 2
      %s32 = sadd.s32 %s25, 1
      %s33 = ssub.s32 %s25, %s32
      %p34 = scmp.eq.s32.totalorder %s33, 0
      %s36 = sadd.s32 %s35, 1
      %s37 = scalar_select %p34, %s35, %s36
      %p40 = pneg %p34
      %p41 = scmp.eq.s32.totalorder %s25, 3
      %p42 = por %p40, %p41
      %p43 = scmp.ne.s32.totalorder %s35, %s38
      %p44 = scmp.eq.s32.totalorder %s25, 0
      %p45 = por %p43, %p44
      %p46 = scmp.ne.s32.totalorder %s35, %s38
      %p47 = scmp.eq.s32.totalorder %s30, 3
      %p48 = por %p46, %p47
      %p49 = scmp.ne.s32.totalorder %s38, %s39
      %p50 = scmp.eq.s32.totalorder %s30, 0
      %p51 = por %p49, %p50
      %p52 = scmp.ne.s32.totalorder %s38, %s39
      %p53 = scmp.eq.s32.totalorder %s31, 3
      %p54 = por %p52, %p53
      %p56 = scmp.ne.s32.totalorder %s39, %s55
      %p57 = scmp.eq.s32.totalorder %s31, 0
      %p58 = por %p56, %p57
      %s59 = ssub.s32 %s25, %s32
      %p60 = scmp.eq.s32.totalorder %s59, 0
      %s62 = sadd.s32 %s61, 1
      %s63 = scalar_select %p60, %s61, %s62
      %p66 = pneg %p60
      %p67 = scmp.eq.s32.totalorder %s25, 3
      %p68 = por %p66, %p67
      %p69 = scmp.ne.s32.totalorder %s61, %s64
      %p70 = scmp.eq.s32.totalorder %s25, 0
      %p71 = por %p69, %p70
      %p72 = scmp.ne.s32.totalorder %s61, %s64
      %p73 = scmp.eq.s32.totalorder %s30, 3
      %p74 = por %p72, %p73
      %p75 = scmp.ne.s32.totalorder %s64, %s65
      %p76 = scmp.eq.s32.totalorder %s30, 0
      %p77 = por %p75, %p76
      %p78 = scmp.ne.s32.totalorder %s64, %s65
      %p79 = scmp.eq.s32.totalorder %s31, 3
      %p80 = por %p78, %p79
      %p82 = scmp.ne.s32.totalorder %s65, %s81
      %p83 = scmp.eq.s32.totalorder %s31, 0
      %p84 = por %p82, %p83
      %s86 = sadd.s32 %s85, 1
      %p89 = scmp.eq.s32.totalorder %s25, 3
      %p90 = scmp.ne.s32.totalorder %s85, %s87
      %p91 = scmp.eq.s32.totalorder %s25, 0
      %p92 = por %p90, %p91
      %p93 = scmp.ne.s32.totalorder %s85, %s87
      %p94 = scmp.eq.s32.totalorder %s30, 3
      %p95 = por %p93, %p94
      %p96 = scmp.ne.s32.totalorder %s87, %s88
      %p97 = scmp.eq.s32.totalorder %s30, 0
      %p98 = por %p96, %p97
      %p99 = scmp.ne.s32.totalorder %s87, %s88
      %p100 = scmp.eq.s32.totalorder %s31, 3
      %p101 = por %p99, %p100
      %p103 = scmp.ne.s32.totalorder %s88, %s102
      %p104 = scmp.eq.s32.totalorder %s31, 0
      %p105 = por %p103, %p104
      %s107 = sadd.s32 %s106, 1
      %p110 = scmp.eq.s32.totalorder %s25, 3
      %p111 = scmp.ne.s32.totalorder %s106, %s108
      %p112 = scmp.eq.s32.totalorder %s25, 0
      %p113 = por %p111, %p112
      %p114 = scmp.ne.s32.totalorder %s106, %s108
      %p115 = scmp.eq.s32.totalorder %s30, 3
      %p116 = por %p114, %p115
      %p117 = scmp.ne.s32.totalorder %s108, %s109
      %p118 = scmp.eq.s32.totalorder %s30, 0
      %p119 = por %p117, %p118
      %p120 = scmp.ne.s32.totalorder %s108, %s109
      %p121 = scmp.eq.s32.totalorder %s31, 3
      %p122 = por %p120, %p121
      %p124 = scmp.ne.s32.totalorder %s109, %s123
      %p125 = scmp.eq.s32.totalorder %s31, 0
      %p126 = por %p124, %p125
      %s128 = sadd.s32 %s127, 1
      %p131 = scmp.eq.s32.totalorder %s25, 3
      %p132 = scmp.ne.s32.totalorder %s127, %s129
      %p133 = scmp.eq.s32.totalorder %s25, 0
      %p134 = por %p132, %p133
      %p135 = scmp.ne.s32.totalorder %s127, %s129
      %p136 = scmp.eq.s32.totalorder %s30, 3
      %p137 = por %p135, %p136
      %p138 = scmp.ne.s32.totalorder %s129, %s130
      %p139 = scmp.eq.s32.totalorder %s30, 0
      %p140 = por %p138, %p139
      %p141 = scmp.ne.s32.totalorder %s129, %s130
      %p142 = scmp.eq.s32.totalorder %s31, 3
      %p143 = por %p141, %p142
      %p145 = scmp.ne.s32.totalorder %s130, %s144
      %p146 = scmp.eq.s32.totalorder %s31, 0
      %p147 = por %p145, %p146
      %s149 = sadd.s32 %s148, 1
      %p152 = scmp.eq.s32.totalorder %s25, 3
      %p153 = scmp.ne.s32.totalorder %s148, %s150
      %p154 = scmp.eq.s32.totalorder %s25, 0
      %p155 = por %p153, %p154
      %p156 = scmp.ne.s32.totalorder %s148, %s150
      %p157 = scmp.eq.s32.totalorder %s30, 3
      %p158 = por %p156, %p157
      %p159 = scmp.ne.s32.totalorder %s150, %s151
      %p160 = scmp.eq.s32.totalorder %s30, 0
      %p161 = por %p159, %p160
      %p162 = scmp.ne.s32.totalorder %s150, %s151
      %p163 = scmp.eq.s32.totalorder %s31, 3
      %p164 = por %p162, %p163
      %p166 = scmp.ne.s32.totalorder %s151, %s165
      %p167 = scmp.eq.s32.totalorder %s31, 0
      %p168 = por %p166, %p167
      %s170 = sadd.s32 %s169, 1
      %p173 = scmp.eq.s32.totalorder %s25, 3
      %p174 = scmp.ne.s32.totalorder %s169, %s171
      %p175 = scmp.eq.s32.totalorder %s25, 0
      %p176 = por %p174, %p175
      %p177 = scmp.ne.s32.totalorder %s169, %s171
      %p178 = scmp.eq.s32.totalorder %s30, 3
      %p179 = por %p177, %p178
      %p180 = scmp.ne.s32.totalorder %s171, %s172
      %p181 = scmp.eq.s32.totalorder %s30, 0
      %p182 = por %p180, %p181
      %p183 = scmp.ne.s32.totalorder %s171, %s172
      %p184 = scmp.eq.s32.totalorder %s31, 3
      %p185 = por %p183, %p184
      %p187 = scmp.ne.s32.totalorder %s172, %s186
      %p188 = scmp.eq.s32.totalorder %s31, 0
      %p189 = por %p187, %p188
      %s191 = sadd.s32 %s190, 1
      %p194 = scmp.eq.s32.totalorder %s25, 3
      %p195 = scmp.ne.s32.totalorder %s190, %s192
      %p196 = scmp.eq.s32.totalorder %s25, 0
      %p197 = por %p195, %p196
      %p198 = scmp.ne.s32.totalorder %s190, %s192
      %p199 = scmp.eq.s32.totalorder %s30, 3
      %p200 = por %p198, %p199
      %p201 = scmp.ne.s32.totalorder %s192, %s193
      %p202 = scmp.eq.s32.totalorder %s30, 0
      %p203 = por %p201, %p202
      %p204 = scmp.ne.s32.totalorder %s192, %s193
      %p205 = scmp.eq.s32.totalorder %s31, 3
      %p206 = por %p204, %p205
      %p208 = scmp.ne.s32.totalorder %s193, %s207
      %p209 = scmp.eq.s32.totalorder %s31, 0
      %p210 = por %p208, %p209
      %s212 = sadd.s32 %s211, 1
      %p215 = scmp.eq.s32.totalorder %s25, 3
      %p216 = scmp.ne.s32.totalorder %s211, %s213
      %p217 = scmp.eq.s32.totalorder %s25, 0
      %p218 = por %p216, %p217
      %p219 = scmp.ne.s32.totalorder %s211, %s213
      %p220 = scmp.eq.s32.totalorder %s30, 3
      %p221 = por %p219, %p220
      %p222 = scmp.ne.s32.totalorder %s213, %s214
      %p223 = scmp.eq.s32.totalorder %s30, 0
      %p224 = por %p222, %p223
      %p225 = scmp.ne.s32.totalorder %s213, %s214
      %p226 = scmp.eq.s32.totalorder %s31, 3
      %p227 = por %p225, %p226
      %p229 = scmp.ne.s32.totalorder %s214, %s228
      %p230 = scmp.eq.s32.totalorder %s31, 0
      %p231 = por %p229, %p230
      %p232 = scmp.le.s32.totalorder 1, %s25
      %p233 = scmp.lt.s32.totalorder %s25, 5
      %p234 = pnand %p232, %p233
      %p235 = pneg %p234
      // Predicated region
      $region9: #{tpu_custom_call.1} parent=5 // pred_check
        _
      $region10: #{tpu_custom_call.1} parent=5 // pred_check_branch
        %237 = sbr.rel (%p234) target = $region12
      $region11: #{tpu_custom_call.1} parent=5 // pred_region
        %s238 = ssub.s32 %s25, 1
        // Predicated region
        $region13: #{tpu_custom_call.1} parent=11 // pred_check
          %p239 = pneg %p98
        $region14: #{tpu_custom_call.1} parent=11 // pred_check_branch
          %241 = sbr.rel (%p239) target = $region16
        $region15: #{tpu_custom_call.1} parent=11 // pred_region
          %s243 = ssub.s32 2048, 2048
          %244 = vsyncadd [#allocation7], %s243
          %s245 = sshll.u32 [#allocation8], 4
          %s246 = int_to_ptr.vmem [resolvable:$true] %s245
          %251 = dma.hbm_to_vmem [thread:$0]  %s2, 2048, %s246, [#allocation7], 128, 128, 8
        $region16: #{tpu_custom_call.1} parent=11 // pred_fallthru
          _
        // Predicated region
        $region17: #{tpu_custom_call.1} parent=11 // pred_check
          %p252 = pneg %p119
        $region18: #{tpu_custom_call.1} parent=11 // pred_check_branch
          %254 = sbr.rel (%p252) target = $region20
        $region19: #{tpu_custom_call.1} parent=11 // pred_region
          %s256 = ssub.s32 1024, 1024
          %257 = vsyncadd [#allocation10], %s256
          %s258 = sshll.u32 [#allocation9], 4
          %s259 = int_to_ptr.vmem [resolvable:$true] %s258
          %264 = dma.hbm_to_vmem [thread:$0]  %s3, 1024, %s259, [#allocation10], 64, 64, 4
        $region20: #{tpu_custom_call.1} parent=11 // pred_fallthru
          _
        // Predicated region
        $region21: #{tpu_custom_call.1} parent=11 // pred_check
          %p265 = pneg %p140
        $region22: #{tpu_custom_call.1} parent=11 // pred_check_branch
          %267 = sbr.rel (%p265) target = $region24
        $region23: #{tpu_custom_call.1} parent=11 // pred_region
          %s269 = ssub.s32 128, 128
          %270 = vsyncadd [#allocation10], %s269
          %s272 = sshll.u32 [#allocation11], 4
          %s273 = int_to_ptr.vmem [resolvable:$true] %s272
          %275 = dma.hbm_to_vmem [thread:$0]  %s4, 128, %s273, [#allocation10]
        $region24: #{tpu_custom_call.1} parent=11 // pred_fallthru
          _
        // Predicated region
        $region25: #{tpu_custom_call.1} parent=11 // pred_check
          %p276 = pneg %p161
        $region26: #{tpu_custom_call.1} parent=11 // pred_check_branch
          %278 = sbr.rel (%p276) target = $region28
        $region27: #{tpu_custom_call.1} parent=11 // pred_region
          %s280 = ssub.s32 1024, 1024
          %281 = vsyncadd [#allocation13], %s280
          %s282 = sshll.u32 [#allocation12], 4
          %s283 = int_to_ptr.vmem [resolvable:$true] %s282
          %288 = dma.hbm_to_vmem [thread:$0]  %s5, 1024, %s283, [#allocation13], 64, 64, 4
        $region28: #{tpu_custom_call.1} parent=11 // pred_fallthru
          _
        // Predicated region
        $region29: #{tpu_custom_call.1} parent=11 // pred_check
          %p289 = pneg %p182
        $region30: #{tpu_custom_call.1} parent=11 // pred_check_branch
          %291 = sbr.rel (%p289) target = $region32
        $region31: #{tpu_custom_call.1} parent=11 // pred_region
          _
        $region32: #{tpu_custom_call.1} parent=11 // pred_fallthru
          _
      $region12: #{tpu_custom_call.1} parent=5 // pred_fallthru
        _
      %p292 = scmp.lt.s32.totalorder %s25, 4
      // Predicated region
      $region33: #{tpu_custom_call.1} parent=5 // pred_check
        %p293 = pneg %p292
      $region34: #{tpu_custom_call.1} parent=5 // pred_check_branch
        %295 = sbr.rel (%p293) target = $region36
      $region35: #{tpu_custom_call.1} parent=5 // pred_region
        // Predicated region
        $region37: #{tpu_custom_call.1} parent=35 // pred_check
          %p296 = pneg %p45
        $region38: #{tpu_custom_call.1} parent=35 // pred_check_branch
          %298 = sbr.rel (%p296) target = $region40
        $region39: #{tpu_custom_call.1} parent=35 // pred_region
          %s299 = sand.u32 %s35, 1
          %s300 = scalar_lea.sflag [#allocation4], %s299
          %s301 = sand.u32 %s35, 1
          %s302 = smul.addr %s301, 8
          %s303 = scalar_lea.vmem [#allocation3], %s302
          %s304 = smul.u32 2, %s25
          %s306 = ssub.s32 128, 128
          %307 = vsyncadd %s300, %s306
          %s308 = smul.addr %s304, 64
          %s309 = scalar_lea.hbm %s0, %s308
          %s311 = sshll.u32 %s303, 4
          %s312 = int_to_ptr.vmem [resolvable:$true] %s311
          %314 = dma.hbm_to_vmem [thread:$0]  %s309, 128, %s312, %s300
        $region40: #{tpu_custom_call.1} parent=35 // pred_fallthru
          _
        // Predicated region
        $region41: #{tpu_custom_call.1} parent=35 // pred_check
          %p315 = pneg %p71
        $region42: #{tpu_custom_call.1} parent=35 // pred_check_branch
          %317 = sbr.rel (%p315) target = $region44
        $region43: #{tpu_custom_call.1} parent=35 // pred_region
          %s318 = sand.u32 %s25, 1
          %s319 = scalar_lea.sflag [#allocation7], %s318
          %s320 = sand.u32 %s61, 1
          %s321 = smul.addr %s320, 128
          %s322 = scalar_lea.vmem [#allocation6], %s321
          %s323 = smul.u32 32, %s25
          %s325 = ssub.s32 2048, 2048
          %326 = vsyncadd %s319, %s325
          %s327 = smul.addr %s323, 64
          %s328 = scalar_lea.hbm %s1, %s327
          %s329 = sshll.u32 %s322, 4
          %s330 = int_to_ptr.vmem [resolvable:$true] %s329
          %335 = dma.hbm_to_vmem [thread:$0]  %s328, 2048, %s330, %s319, 64, 64, 4
        $region44: #{tpu_custom_call.1} parent=35 // pred_fallthru
          _
      $region36: #{tpu_custom_call.1} parent=5 // pred_fallthru
        _
      %p336 = scmp.le.s32.totalorder 1, %s25
      %p337 = scmp.lt.s32.totalorder %s25, 5
      %p338 = pnand %p336, %p337
      %p339 = pneg %p338
      // Predicated region
      $region45: #{tpu_custom_call.1} parent=5 // pred_check
        _
      $region46: #{tpu_custom_call.1} parent=5 // pred_check_branch
        %341 = sbr.rel (%p338) target = $region48
      $region47: #{tpu_custom_call.1} parent=5 // pred_region
        %s342 = ssub.s32 %s25, 1
        %s343 = sand.u32 %s38, 1
        %s344 = scalar_lea.sflag [#allocation4], %s343
        %s345 = sand.u32 %s38, 1
        %s346 = smul.addr %s345, 8
        %s347 = scalar_lea.vmem [#allocation3], %s346
        // Predicated region
        $region49: #{tpu_custom_call.1} parent=47 // pred_check
          %p348 = pneg %p51
        $region50: #{tpu_custom_call.1} parent=47 // pred_check_branch
          %350 = sbr.rel (%p348) target = $region52
        $region51: #{tpu_custom_call.1} parent=47 // pred_region
          %351 = dma.done %s344, 128
        $region52: #{tpu_custom_call.1} parent=47 // pred_fallthru
          _
        %s352 = sand.u32 %s30, 1
        %s353 = scalar_lea.sflag [#allocation7], %s352
        %s354 = sand.u32 %s64, 1
        %s355 = smul.addr %s354, 128
        %s356 = scalar_lea.vmem [#allocation6], %s355
        // Predicated region
        $region53: #{tpu_custom_call.1} parent=47 // pred_check
          %p357 = pneg %p77
        $region54: #{tpu_custom_call.1} parent=47 // pred_check_branch
          %359 = sbr.rel (%p357) target = $region56
        $region55: #{tpu_custom_call.1} parent=47 // pred_region
          %360 = dma.done %s353, 2048
        $region56: #{tpu_custom_call.1} parent=47 // pred_fallthru
          _
        // Predicated region
        $region57: #{tpu_custom_call.1} parent=47 // pred_check
          %p361 = pneg %p98
        $region58: #{tpu_custom_call.1} parent=47 // pred_check_branch
          %363 = sbr.rel (%p361) target = $region60
        $region59: #{tpu_custom_call.1} parent=47 // pred_region
          %364 = dma.done [#allocation7], 2048
        $region60: #{tpu_custom_call.1} parent=47 // pred_fallthru
          _
        // Predicated region
        $region61: #{tpu_custom_call.1} parent=47 // pred_check
          %p365 = pneg %p119
        $region62: #{tpu_custom_call.1} parent=47 // pred_check_branch
          %367 = sbr.rel (%p365) target = $region64
        $region63: #{tpu_custom_call.1} parent=47 // pred_region
          %368 = dma.done [#allocation10], 1024
        $region64: #{tpu_custom_call.1} parent=47 // pred_fallthru
          _
        // Predicated region
        $region65: #{tpu_custom_call.1} parent=47 // pred_check
          %p369 = pneg %p140
        $region66: #{tpu_custom_call.1} parent=47 // pred_check_branch
          %371 = sbr.rel (%p369) target = $region68
        $region67: #{tpu_custom_call.1} parent=47 // pred_region
          %372 = dma.done [#allocation10], 128
        $region68: #{tpu_custom_call.1} parent=47 // pred_fallthru
          _
        // Predicated region
        $region69: #{tpu_custom_call.1} parent=47 // pred_check
          %p373 = pneg %p161
        $region70: #{tpu_custom_call.1} parent=47 // pred_check_branch
          %375 = sbr.rel (%p373) target = $region72
        $region71: #{tpu_custom_call.1} parent=47 // pred_region
          %376 = dma.done [#allocation13], 1024
        $region72: #{tpu_custom_call.1} parent=47 // pred_fallthru
          _
        %s377 = sand.u32 %s38, 1
        %s378 = scalar_lea.sflag [#allocation4], %s377
        %s379 = sand.u32 %s38, 1
        %s380 = smul.addr %s379, 8
        %s381 = scalar_lea.vmem [#allocation3], %s380
        %p382 = pneg %p51
        %p383 = pneg %p48
        %s384 = sand.u32 %s30, 1
        %s385 = scalar_lea.sflag [#allocation7], %s384
        %s386 = sand.u32 %s64, 1
        %s387 = smul.addr %s386, 128
        %s388 = scalar_lea.vmem [#allocation6], %s387
        %p389 = pneg %p77
        %p390 = pneg %p74
        %p391 = pneg %p98
        %p392 = pneg %p95
        %p393 = pneg %p119
        %p394 = pneg %p116
        %p395 = pneg %p140
        %p396 = pneg %p137
        %p397 = pneg %p161
        %p398 = pneg %p158
        %p399 = pneg %p182
        %p400 = pneg %p179
        %p401 = pneg %p203
        %p402 = pneg %p200
        %p403 = pneg %p224
        %p404 = pneg %p221
        %s405 = smul.u32 2, %s30
        %s406 = smul.u32 32, %s30
        %p408 = scmp.eq.s32.totalorder %s30, 0
        // Predicated region
        $region73: #{tpu_custom_call.1} parent=47 // pred_check
          %p409 = pneg %p408
        $region74: #{tpu_custom_call.1} parent=47 // pred_check_branch
          %411 = sbr.rel (%p409) target = $region76
        $region75: #{tpu_custom_call.1} parent=47 // pred_region
          %412 = vst [vmem:[#allocation2] sm:$0xff] 0.0
        $region76: #{tpu_custom_call.1} parent=47 // pred_fallthru
          _
        %v413 = vld [vmem:[#allocation2] sm:$0xff]
        %v414 = vld [vmem:[%s347] sm:$0xff]
        %v415 = vld [vmem:[%s356] sm:$0xf]
        %v416 = vld [vmem:[%s356 + $0x4] sm:$0xf]
        %v417 = vld [vmem:[%s356 + $0x8] sm:$0xf]
        %v418 = vld [vmem:[%s356 + $0xc] sm:$0xf]
        %v419 = vld [vmem:[%s356 + $0x10] sm:$0xf]
        %v420 = vld [vmem:[%s356 + $0x14] sm:$0xf]
        %v421 = vld [vmem:[%s356 + $0x18] sm:$0xf]
        %v422 = vld [vmem:[%s356 + $0x1c] sm:$0xf]
        %v423 = vld [vmem:[%s356 + $0x20] sm:$0xf]
        %v424 = vld [vmem:[%s356 + $0x24] sm:$0xf]
        %v425 = vld [vmem:[%s356 + $0x28] sm:$0xf]
        %v426 = vld [vmem:[%s356 + $0x2c] sm:$0xf]
        %v427 = vld [vmem:[%s356 + $0x30] sm:$0xf]
        %v428 = vld [vmem:[%s356 + $0x34] sm:$0xf]
        %v429 = vld [vmem:[%s356 + $0x38] sm:$0xf]
        %v430 = vld [vmem:[%s356 + $0x3c] sm:$0xf]
        %v431 = vld [vmem:[%s356 + $0x40] sm:$0xf]
        %v432 = vld [vmem:[%s356 + $0x44] sm:$0xf]
        %v433 = vld [vmem:[%s356 + $0x48] sm:$0xf]
        %v434 = vld [vmem:[%s356 + $0x4c] sm:$0xf]
        %v435 = vld [vmem:[%s356 + $0x50] sm:$0xf]
        %v436 = vld [vmem:[%s356 + $0x54] sm:$0xf]
        %v437 = vld [vmem:[%s356 + $0x58] sm:$0xf]
        %v438 = vld [vmem:[%s356 + $0x5c] sm:$0xf]
        %v439 = vld [vmem:[%s356 + $0x60] sm:$0xf]
        %v440 = vld [vmem:[%s356 + $0x64] sm:$0xf]
        %v441 = vld [vmem:[%s356 + $0x68] sm:$0xf]
        %v442 = vld [vmem:[%s356 + $0x6c] sm:$0xf]
        %v443 = vld [vmem:[%s356 + $0x70] sm:$0xf]
        %v444 = vld [vmem:[%s356 + $0x74] sm:$0xf]
        %v445 = vld [vmem:[%s356 + $0x78] sm:$0xf]
        %v446 = vld [vmem:[%s356 + $0x7c] sm:$0xf]
        %v448 = vunpack.c.l.b16 %v414
        %v449 = vunpack.c.h.b16 %v414
        %v450 = vpack.c.b16 %v448, %v448
        %v451 = vpack.c.b16 %v449, %v449
        %v486 = vunpack.c.l.b16 %v415
        %v487 = vunpack.c.l.b16 %v416
        %v488 = vunpack.c.l.b16 %v417
        %v489 = vunpack.c.l.b16 %v418
        %v490 = vunpack.c.l.b16 %v419
        %v491 = vunpack.c.l.b16 %v420
        %v492 = vunpack.c.l.b16 %v421
        %v493 = vunpack.c.l.b16 %v422
        %v494 = vunpack.c.l.b16 %v423
        %v495 = vunpack.c.l.b16 %v424
        %v496 = vunpack.c.l.b16 %v425
        %v497 = vunpack.c.l.b16 %v426
        %v498 = vunpack.c.l.b16 %v427
        %v499 = vunpack.c.l.b16 %v428
        %v500 = vunpack.c.l.b16 %v429
        %v501 = vunpack.c.l.b16 %v430
        %v502 = vunpack.c.l.b16 %v431
        %v503 = vunpack.c.l.b16 %v432
        %v504 = vunpack.c.l.b16 %v433
        %v505 = vunpack.c.l.b16 %v434
        %v506 = vunpack.c.l.b16 %v435
        %v507 = vunpack.c.l.b16 %v436
        %v508 = vunpack.c.l.b16 %v437
        %v509 = vunpack.c.l.b16 %v438
        %v510 = vunpack.c.l.b16 %v439
        %v511 = vunpack.c.l.b16 %v440
        %v512 = vunpack.c.l.b16 %v441
        %v513 = vunpack.c.l.b16 %v442
        %v514 = vunpack.c.l.b16 %v443
        %v515 = vunpack.c.l.b16 %v444
        %v516 = vunpack.c.l.b16 %v445
        %v517 = vunpack.c.l.b16 %v446
        %v518 = vpack.c.b16 %v487, %v486
        %v519 = vpack.c.b16 %v489, %v488
        %v520 = vpack.c.b16 %v491, %v490
        %v521 = vpack.c.b16 %v493, %v492
        %v522 = vpack.c.b16 %v495, %v494
        %v523 = vpack.c.b16 %v497, %v496
        %v524 = vpack.c.b16 %v499, %v498
        %v525 = vpack.c.b16 %v501, %v500
        %v526 = vpack.c.b16 %v503, %v502
        %v527 = vpack.c.b16 %v505, %v504
        %v528 = vpack.c.b16 %v507, %v506
        %v529 = vpack.c.b16 %v509, %v508
        %v530 = vpack.c.b16 %v511, %v510
        %v531 = vpack.c.b16 %v513, %v512
        %v532 = vpack.c.b16 %v515, %v514
        %v533 = vpack.c.b16 %v517, %v516
        %550 = vmatprep.subr.bf16.mxu0 0
        %551 = vmatpush1.bf16.msra.mxu0 %v525
        %552 = vmatprep.subr.bf16.mxu0 0
        %553 = vmatpush1.bf16.msra.mxu0 %v524
        %554 = vmatprep.subr.bf16.mxu0 0
        %555 = vmatpush1.bf16.msra.mxu0 %v523
        %556 = vmatprep.subr.bf16.mxu0 0
        %557 = vmatpush1.bf16.msra.mxu0 %v522
        %558 = vmatprep.subr.bf16.mxu0 0
        %559 = vmatpush1.bf16.msra.mxu0 %v521
        %560 = vmatprep.subr.bf16.mxu0 0
        %561 = vmatpush1.bf16.msra.mxu0 %v520
        %562 = vmatprep.subr.bf16.mxu0 0
        %563 = vmatpush1.bf16.msra.mxu0 %v519
        %564 = vmatprep.subr.bf16.mxu0 0
        %565 = vmatpush1.bf16.msra.mxu0 %v518
        %566 = vmatprep.subr.bf16.mxu0 0
        %567 = vmatpush2.bf16.msra.mxu0 %v533
        %568 = vmatprep.subr.bf16.mxu0 0
        %569 = vmatpush2.bf16.msra.mxu0 %v532
        %570 = vmatprep.subr.bf16.mxu0 0
        %571 = vmatpush2.bf16.msra.mxu0 %v531
        %572 = vmatprep.subr.bf16.mxu0 0
        %573 = vmatpush2.bf16.msra.mxu0 %v530
        %574 = vmatprep.subr.bf16.mxu0 0
        %575 = vmatpush2.bf16.msra.mxu0 %v529
        %576 = vmatprep.subr.bf16.mxu0 0
        %577 = vmatpush2.bf16.msra.mxu0 %v528
        %578 = vmatprep.subr.bf16.mxu0 0
        %579 = vmatpush2.bf16.msra.mxu0 %v527
        %580 = vmatprep.subr.bf16.mxu0 0
        %581 = vmatpush2.bf16.msra.mxu0 %v526
        %582 = vmatprep.mubr.bf16.mxu0 %v451
        %583 = vmatmul.mubr.bf16.gmra.mxu0 %v450
        %v584 = vpop.f32.mrf.mxu0
        %v585 = vadd.f32 0.0, %v584
        %v586 = vpop.f32.mrf.mxu0
        %v587 = vpop.f32.mrf.mxu0
        %v588 = vpop.f32.mrf.mxu0
        %589 = vdwg.mxu0
        %v590 = vadd.f32 %v413, %v585
        %591 = vst [vmem:[#allocation2] sm:$0xff] %v590
        %p592 = scmp.eq.s32.totalorder %s30, 3
        // Predicated region
        $region77: #{tpu_custom_call.1} parent=47 // pred_check
          %p593 = pneg %p592
        $region78: #{tpu_custom_call.1} parent=47 // pred_check_branch
          %595 = sbr.rel (%p593) target = $region80
        $region79: #{tpu_custom_call.1} parent=47 // pred_region
          %v596 = vld [vmem:[#allocation2] sm:$0xff]
          %v597 = vpack.c.bf16 %v596, %v596
          %v598 = vld [vmem:[#allocation8] sm:$0xff]
          %v599 = vld [vmem:[#allocation8 + $0x8] sm:$0xff]
          %v600 = vld [vmem:[#allocation8 + $0x10] sm:$0xff]
          %v601 = vld [vmem:[#allocation8 + $0x18] sm:$0xff]
          %v602 = vld [vmem:[#allocation8 + $0x20] sm:$0xff]
          %v603 = vld [vmem:[#allocation8 + $0x28] sm:$0xff]
          %v604 = vld [vmem:[#allocation8 + $0x30] sm:$0xff]
          %v605 = vld [vmem:[#allocation8 + $0x38] sm:$0xff]
          %v606 = vld [vmem:[#allocation8 + $0x40] sm:$0xff]
          %v607 = vld [vmem:[#allocation8 + $0x48] sm:$0xff]
          %v608 = vld [vmem:[#allocation8 + $0x50] sm:$0xff]
          %v609 = vld [vmem:[#allocation8 + $0x58] sm:$0xff]
          %v610 = vld [vmem:[#allocation8 + $0x60] sm:$0xff]
          %v611 = vld [vmem:[#allocation8 + $0x68] sm:$0xff]
          %v612 = vld [vmem:[#allocation8 + $0x70] sm:$0xff]
          %v613 = vld [vmem:[#allocation8 + $0x78] sm:$0xff]
          %v630 = vunpack.c.l.b16 %v598
          %v631 = vunpack.c.h.b16 %v598
          %v632 = vunpack.c.l.b16 %v599
          %v633 = vunpack.c.h.b16 %v599
          %v634 = vunpack.c.l.b16 %v600
          %v635 = vunpack.c.h.b16 %v600
          %v636 = vunpack.c.l.b16 %v601
          %v637 = vunpack.c.h.b16 %v601
          %v638 = vunpack.c.l.b16 %v602
          %v639 = vunpack.c.h.b16 %v602
          %v640 = vunpack.c.l.b16 %v603
          %v641 = vunpack.c.h.b16 %v603
          %v642 = vunpack.c.l.b16 %v604
          %v643 = vunpack.c.h.b16 %v604
          %v644 = vunpack.c.l.b16 %v605
          %v645 = vunpack.c.h.b16 %v605
          %v646 = vunpack.c.l.b16 %v606
          %v647 = vunpack.c.h.b16 %v606
          %v648 = vunpack.c.l.b16 %v607
          %v649 = vunpack.c.h.b16 %v607
          %v650 = vunpack.c.l.b16 %v608
          %v651 = vunpack.c.h.b16 %v608
          %v652 = vunpack.c.l.b16 %v609
          %v653 = vunpack.c.h.b16 %v609
          %v654 = vunpack.c.l.b16 %v610
          %v655 = vunpack.c.h.b16 %v610
          %v656 = vunpack.c.l.b16 %v611
          %v657 = vunpack.c.h.b16 %v611
          %v658 = vunpack.c.l.b16 %v612
          %v659 = vunpack.c.h.b16 %v612
          %v660 = vunpack.c.l.b16 %v613
          %v661 = vunpack.c.h.b16 %v613
          %v662 = vpack.c.b16 %v632, %v630
          %v663 = vpack.c.b16 %v633, %v631
          %v664 = vpack.c.b16 %v636, %v634
          %v665 = vpack.c.b16 %v637, %v635
          %v666 = vpack.c.b16 %v640, %v638
          %v667 = vpack.c.b16 %v641, %v639
          %v668 = vpack.c.b16 %v644, %v642
          %v669 = vpack.c.b16 %v645, %v643
          %v670 = vpack.c.b16 %v648, %v646
          %v671 = vpack.c.b16 %v649, %v647
          %v672 = vpack.c.b16 %v652, %v650
          %v673 = vpack.c.b16 %v653, %v651
          %v674 = vpack.c.b16 %v656, %v654
          %v675 = vpack.c.b16 %v657, %v655
          %v676 = vpack.c.b16 %v660, %v658
          %v677 = vpack.c.b16 %v661, %v659
          %694 = vmatprep.subr.bf16.mxu0 %v677
          %695 = vmatpush1.bf16.msra.mxu0 %v676
          %696 = vmatprep.subr.bf16.mxu0 %v675
          %697 = vmatpush1.bf16.msra.mxu0 %v674
          %698 = vmatprep.subr.bf16.mxu0 %v673
          %699 = vmatpush1.bf16.msra.mxu0 %v672
          %700 = vmatprep.subr.bf16.mxu0 %v671
          %701 = vmatpush1.bf16.msra.mxu0 %v670
          %702 = vmatprep.subr.bf16.mxu0 %v669
          %703 = vmatpush1.bf16.msra.mxu0 %v668
          %704 = vmatprep.subr.bf16.mxu0 %v667
          %705 = vmatpush1.bf16.msra.mxu0 %v666
          %706 = vmatprep.subr.bf16.mxu0 %v665
          %707 = vmatpush1.bf16.msra.mxu0 %v664
          %708 = vmatprep.subr.bf16.mxu0 %v663
          %709 = vmatpush1.bf16.msra.mxu0 %v662
          %710 = vmatprep.subr.bf16.mxu0 0
          %711 = vmatpush2.bf16.msra.mxu0 0
          %712 = vmatprep.subr.bf16.mxu0 0
          %713 = vmatpush2.bf16.msra.mxu0 0
          %714 = vmatprep.subr.bf16.mxu0 0
          %715 = vmatpush2.bf16.msra.mxu0 0
          %716 = vmatprep.subr.bf16.mxu0 0
          %717 = vmatpush2.bf16.msra.mxu0 0
          %718 = vmatprep.subr.bf16.mxu0 0
          %719 = vmatpush2.bf16.msra.mxu0 0
          %720 = vmatprep.subr.bf16.mxu0 0
          %721 = vmatpush2.bf16.msra.mxu0 0
          %722 = vmatprep.subr.bf16.mxu0 0
          %723 = vmatpush2.bf16.msra.mxu0 0
          %724 = vmatprep.subr.bf16.mxu0 0
          %725 = vmatpush2.bf16.msra.mxu0 0
          %726 = vmatprep.mubr.bf16.mxu0 0
          %727 = vmatmul.mubr.bf16.gmra.mxu0 %v597
          %v728 = vpop.f32.mrf.mxu0
          %v729 = vadd.f32 0.0, %v728
          %v730 = vpop.f32.mrf.mxu0
          %v731 = vadd.f32 0.0, %v730
          %v732 = vpop.f32.mrf.mxu0
          %v733 = vpop.f32.mrf.mxu0
          %734 = vdwg.mxu0
          %v735 = vld [vmem:[#allocation11] sm:$0xff]
          %v736 = vmul.f32 %v731, %v735
          %v737 = vpack.c.bf16 %v736, %v736
          %v738 = vld [vmem:[#allocation9] sm:$0xf]
          %v739 = vld [vmem:[#allocation9 + $0x4] sm:$0xf]
          %v740 = vld [vmem:[#allocation9 + $0x8] sm:$0xf]
          %v741 = vld [vmem:[#allocation9 + $0xc] sm:$0xf]
          %v742 = vld [vmem:[#allocation9 + $0x10] sm:$0xf]
          %v743 = vld [vmem:[#allocation9 + $0x14] sm:$0xf]
          %v744 = vld [vmem:[#allocation9 + $0x18] sm:$0xf]
          %v745 = vld [vmem:[#allocation9 + $0x1c] sm:$0xf]
          %v746 = vld [vmem:[#allocation9 + $0x20] sm:$0xf]
          %v747 = vld [vmem:[#allocation9 + $0x24] sm:$0xf]
          %v748 = vld [vmem:[#allocation9 + $0x28] sm:$0xf]
          %v749 = vld [vmem:[#allocation9 + $0x2c] sm:$0xf]
          %v750 = vld [vmem:[#allocation9 + $0x30] sm:$0xf]
          %v751 = vld [vmem:[#allocation9 + $0x34] sm:$0xf]
          %v752 = vld [vmem:[#allocation9 + $0x38] sm:$0xf]
          %v753 = vld [vmem:[#allocation9 + $0x3c] sm:$0xf]
          %v770 = vunpack.c.l.b16 %v738
          %v771 = vunpack.c.l.b16 %v739
          %v772 = vunpack.c.l.b16 %v740
          %v773 = vunpack.c.l.b16 %v741
          %v774 = vunpack.c.l.b16 %v742
          %v775 = vunpack.c.l.b16 %v743
          %v776 = vunpack.c.l.b16 %v744
          %v777 = vunpack.c.l.b16 %v745
          %v778 = vunpack.c.l.b16 %v746
          %v779 = vunpack.c.l.b16 %v747
          %v780 = vunpack.c.l.b16 %v748
          %v781 = vunpack.c.l.b16 %v749
          %v782 = vunpack.c.l.b16 %v750
          %v783 = vunpack.c.l.b16 %v751
          %v784 = vunpack.c.l.b16 %v752
          %v785 = vunpack.c.l.b16 %v753
          %v786 = vpack.c.b16 %v771, %v770
          %v787 = vpack.c.b16 %v773, %v772
          %v788 = vpack.c.b16 %v775, %v774
          %v789 = vpack.c.b16 %v777, %v776
          %v790 = vpack.c.b16 %v779, %v778
          %v791 = vpack.c.b16 %v781, %v780
          %v792 = vpack.c.b16 %v783, %v782
          %v793 = vpack.c.b16 %v785, %v784
          %802 = vmatprep.subr.bf16.mxu0 0
          %803 = vmatpush1.bf16.msra.mxu0 %v793
          %804 = vmatprep.subr.bf16.mxu0 0
          %805 = vmatpush1.bf16.msra.mxu0 %v792
          %806 = vmatprep.subr.bf16.mxu0 0
          %807 = vmatpush1.bf16.msra.mxu0 %v791
          %808 = vmatprep.subr.bf16.mxu0 0
          %809 = vmatpush1.bf16.msra.mxu0 %v790
          %810 = vmatprep.subr.bf16.mxu0 0
          %811 = vmatpush1.bf16.msra.mxu0 %v789
          %812 = vmatprep.subr.bf16.mxu0 0
          %813 = vmatpush1.bf16.msra.mxu0 %v788
          %814 = vmatprep.subr.bf16.mxu0 0
          %815 = vmatpush1.bf16.msra.mxu0 %v787
          %816 = vmatprep.subr.bf16.mxu0 0
          %817 = vmatpush1.bf16.msra.mxu0 %v786
          %818 = vmatprep.subr.bf16.mxu0 0
          %819 = vmatpush2.bf16.msra.mxu0 0
          %820 = vmatprep.subr.bf16.mxu0 0
          %821 = vmatpush2.bf16.msra.mxu0 0
          %822 = vmatprep.subr.bf16.mxu0 0
          %823 = vmatpush2.bf16.msra.mxu0 0
          %824 = vmatprep.subr.bf16.mxu0 0
          %825 = vmatpush2.bf16.msra.mxu0 0
          %826 = vmatprep.subr.bf16.mxu0 0
          %827 = vmatpush2.bf16.msra.mxu0 0
          %828 = vmatprep.subr.bf16.mxu0 0
          %829 = vmatpush2.bf16.msra.mxu0 0
          %830 = vmatprep.subr.bf16.mxu0 0
          %831 = vmatpush2.bf16.msra.mxu0 0
          %832 = vmatprep.subr.bf16.mxu0 0
          %833 = vmatpush2.bf16.msra.mxu0 0
          %834 = vmatprep.mubr.bf16.mxu0 0
          %835 = vmatmul.mubr.bf16.gmra.mxu0 %v737
          %v836 = vpop.f32.mrf.mxu0
          %v837 = vadd.f32 0.0, %v836
          %v838 = vpop.f32.mrf.mxu0
          %v839 = vpop.f32.mrf.mxu0
          %v840 = vpop.f32.mrf.mxu0
          %841 = vdwg.mxu0
          %v842 = vadd.f32 %v729, %v837
          %v843 = vpack.c.bf16 %v842, %v842
          %v844 = vld [vmem:[#allocation12] sm:$0xf]
          %v845 = vld [vmem:[#allocation12 + $0x4] sm:$0xf]
          %v846 = vld [vmem:[#allocation12 + $0x8] sm:$0xf]
          %v847 = vld [vmem:[#allocation12 + $0xc] sm:$0xf]
          %v848 = vld [vmem:[#allocation12 + $0x10] sm:$0xf]
          %v849 = vld [vmem:[#allocation12 + $0x14] sm:$0xf]
          %v850 = vld [vmem:[#allocation12 + $0x18] sm:$0xf]
          %v851 = vld [vmem:[#allocation12 + $0x1c] sm:$0xf]
          %v852 = vld [vmem:[#allocation12 + $0x20] sm:$0xf]
          %v853 = vld [vmem:[#allocation12 + $0x24] sm:$0xf]
          %v854 = vld [vmem:[#allocation12 + $0x28] sm:$0xf]
          %v855 = vld [vmem:[#allocation12 + $0x2c] sm:$0xf]
          %v856 = vld [vmem:[#allocation12 + $0x30] sm:$0xf]
          %v857 = vld [vmem:[#allocation12 + $0x34] sm:$0xf]
          %v858 = vld [vmem:[#allocation12 + $0x38] sm:$0xf]
          %v859 = vld [vmem:[#allocation12 + $0x3c] sm:$0xf]
          %v860 = vld [vmem:[%s6] sm:$0x1]
          %v862 = vlaneseq
          %v863 = vshrl.u32 %v862, 7
          %v864 = vsub.s32 0, %v863
          %v865 = vrot.slane %v860, %v864
          %v883 = vunpack.c.l.b16 %v844
          %v884 = vunpack.c.l.b16 %v845
          %v885 = vunpack.c.l.b16 %v846
          %v886 = vunpack.c.l.b16 %v847
          %v887 = vunpack.c.l.b16 %v848
          %v888 = vunpack.c.l.b16 %v849
          %v889 = vunpack.c.l.b16 %v850
          %v890 = vunpack.c.l.b16 %v851
          %v891 = vunpack.c.l.b16 %v852
          %v892 = vunpack.c.l.b16 %v853
          %v893 = vunpack.c.l.b16 %v854
          %v894 = vunpack.c.l.b16 %v855
          %v895 = vunpack.c.l.b16 %v856
          %v896 = vunpack.c.l.b16 %v857
          %v897 = vunpack.c.l.b16 %v858
          %v898 = vunpack.c.l.b16 %v859
          %v899 = vpack.c.b16 %v884, %v883
          %v900 = vpack.c.b16 %v886, %v885
          %v901 = vpack.c.b16 %v888, %v887
          %v902 = vpack.c.b16 %v890, %v889
          %v903 = vpack.c.b16 %v892, %v891
          %v904 = vpack.c.b16 %v894, %v893
          %v905 = vpack.c.b16 %v896, %v895
          %v906 = vpack.c.b16 %v898, %v897
          %915 = vmatprep.subr.bf16.mxu0 0
          %916 = vmatpush1.bf16.msra.mxu0 %v906
          %917 = vmatprep.subr.bf16.mxu0 0
          %918 = vmatpush1.bf16.msra.mxu0 %v905
          %919 = vmatprep.subr.bf16.mxu0 0
          %920 = vmatpush1.bf16.msra.mxu0 %v904
          %921 = vmatprep.subr.bf16.mxu0 0
          %922 = vmatpush1.bf16.msra.mxu0 %v903
          %923 = vmatprep.subr.bf16.mxu0 0
          %924 = vmatpush1.bf16.msra.mxu0 %v902
          %925 = vmatprep.subr.bf16.mxu0 0
          %926 = vmatpush1.bf16.msra.mxu0 %v901
          %927 = vmatprep.subr.bf16.mxu0 0
          %928 = vmatpush1.bf16.msra.mxu0 %v900
          %929 = vmatprep.subr.bf16.mxu0 0
          %930 = vmatpush1.bf16.msra.mxu0 %v899
          %931 = vmatprep.subr.bf16.mxu0 0
          %932 = vmatpush2.bf16.msra.mxu0 0
          %933 = vmatprep.subr.bf16.mxu0 0
          %934 = vmatpush2.bf16.msra.mxu0 0
          %935 = vmatprep.subr.bf16.mxu0 0
          %936 = vmatpush2.bf16.msra.mxu0 0
          %937 = vmatprep.subr.bf16.mxu0 0
          %938 = vmatpush2.bf16.msra.mxu0 0
          %939 = vmatprep.subr.bf16.mxu0 0
          %940 = vmatpush2.bf16.msra.mxu0 0
          %941 = vmatprep.subr.bf16.mxu0 0
          %942 = vmatpush2.bf16.msra.mxu0 0
          %943 = vmatprep.subr.bf16.mxu0 0
          %944 = vmatpush2.bf16.msra.mxu0 0
          %945 = vmatprep.subr.bf16.mxu0 0
          %946 = vmatpush2.bf16.msra.mxu0 0
          %947 = vmatprep.mubr.bf16.mxu0 0
          %948 = vmatmul.mubr.bf16.gmra.mxu0 %v843
          %v949 = vpop.f32.mrf.mxu0
          %v950 = vadd.f32 %v865, %v949
          %v951 = vpop.f32.mrf.mxu0
          %v952 = vpop.f32.mrf.mxu0
          %v953 = vpop.f32.mrf.mxu0
          %954 = vdwg.mxu0
          %955 = vst [vmem:[#allocation15] sm:$0xff] %v842
          %956 = vst [vmem:[#allocation14] sm:$0xff] %v950
        $region80: #{tpu_custom_call.1} parent=47 // pred_fallthru
          _
        // Predicated region
        $region81: #{tpu_custom_call.1} parent=47 // pred_check
          %p957 = pneg %p200
        $region82: #{tpu_custom_call.1} parent=47 // pred_check_branch
          %959 = sbr.rel (%p957) target = $region84
        $region83: #{tpu_custom_call.1} parent=47 // pred_region
          %s961 = ssub.s32 128, 128
          %962 = vsyncadd [#allocation5], %s961
          %s964 = sshll.u32 [#allocation14], 4
          %s965 = int_to_ptr.vmem [resolvable:$true] %s964
          %967 = dma.vmem_to_hbm [thread:$0]  %s965, 128, %s7, [#allocation5]
        $region84: #{tpu_custom_call.1} parent=47 // pred_fallthru
          _
        // Predicated region
        $region85: #{tpu_custom_call.1} parent=47 // pred_check
          %p968 = pneg %p221
        $region86: #{tpu_custom_call.1} parent=47 // pred_check_branch
          %970 = sbr.rel (%p968) target = $region88
        $region87: #{tpu_custom_call.1} parent=47 // pred_region
          %s972 = ssub.s32 128, 128
          %973 = vsyncadd [#allocation16], %s972
          %s975 = sshll.u32 [#allocation15], 4
          %s976 = int_to_ptr.vmem [resolvable:$true] %s975
          %978 = dma.vmem_to_hbm [thread:$0]  %s976, 128, %s8, [#allocation16]
        $region88: #{tpu_custom_call.1} parent=47 // pred_fallthru
          _
        // Predicated region
        $region89: #{tpu_custom_call.1} parent=47 // pred_check
          %p979 = pneg %p200
        $region90: #{tpu_custom_call.1} parent=47 // pred_check_branch
          %981 = sbr.rel (%p979) target = $region92
        $region91: #{tpu_custom_call.1} parent=47 // pred_region
          %982 = dma.done [#allocation5], 128
        $region92: #{tpu_custom_call.1} parent=47 // pred_fallthru
          _
        // Predicated region
        $region93: #{tpu_custom_call.1} parent=47 // pred_check
          %p983 = pneg %p221
        $region94: #{tpu_custom_call.1} parent=47 // pred_check_branch
          %985 = sbr.rel (%p983) target = $region96
        $region95: #{tpu_custom_call.1} parent=47 // pred_region
          %986 = dma.done [#allocation16], 128
        $region96: #{tpu_custom_call.1} parent=47 // pred_fallthru
          _
      $region48: #{tpu_custom_call.1} parent=5 // pred_fallthru
        _
      %p987 = scmp.le.s32.totalorder 2, %s25
      // Predicated region
      $region97: #{tpu_custom_call.1} parent=5 // pred_check
        %p988 = pneg %p987
      $region98: #{tpu_custom_call.1} parent=5 // pred_check_branch
        %990 = sbr.rel (%p988) target = $region100
      $region99: #{tpu_custom_call.1} parent=5 // pred_region
        %s991 = ssub.s32 %s25, 2
      $region100: #{tpu_custom_call.1} parent=5 // pred_fallthru
        _
    $region6: #{tpu_custom_call.1} parent=1 // loop_footer
      %s29 = sadd.s32 1, %s25
    $region7: #{tpu_custom_call.1} parent=1 // loop_footer_branch
      %24 = sbr.rel target = $region3
    $region8: #{tpu_custom_call.1} parent=1 // loop_exit
      _
    %992 = vsyncpa [#allocation4], 1
    %s993 = scalar_lea.sflag [#allocation4], 1
    %994 = vsyncpa %s993, 1
    %995 = vsyncpa [#allocation7], 1
    %s996 = scalar_lea.sflag [#allocation7], 1
    %997 = vsyncpa %s996, 1
    %998 = vsyncpa [#allocation10], 1
    %999 = vsyncpa [#allocation13], 1
    %1000 = vsyncpa [#allocation5], 1
    %s1001 = scalar_lea.sflag [#allocation5], 1
    %1002 = vsyncpa %s1001, 1
    %1003 = vsyncpa [#allocation16], 1

</llo_original>
